<compile_context>
chip_gen: v6e
topology: v6e:2x2x1
jax: 0.10.0
libtpu: 0.0.40
codegen_flags: <defaults>
</compile_context>

<pallas_src>
import jax
import jax.numpy as jnp
from jax import lax
from jax.experimental import pallas as pl
from jax.experimental.pallas import tpu as pltpu

EMBED_DIM = 32   # shared CLIP embedding dim
TXT_DIM = 32     # token embedding dim
VOCAB = 64       # synthetic vocab size


def _round_up(x, m):
    return ((x + m - 1) // m) * m


# ----------------------------------------------------------------------------- kernels
def _clip_general_kernel(img_ref, w_img_ref, b_img_ref, txt_ref, out_ref, acc_ref):
    """Grid = (image tiles [parallel], K tiles [arbitrary]).

    img_ref  : [tm, tk]        f32  (cast to bf16 in-kernel, right before the MXU dot)
    w_img_ref: [tk, D_pad]     bf16 (K-tiled image-projection weight)
    b_img_ref: [1, D_pad]      f32  (resident)
    txt_ref  : [Bt_pad, D_pad] bf16 (resident text embeddings)
    out_ref  : [tm, Bt_pad]    f32
    acc_ref  : [tm, D_pad]     f32 VMEM scratch (image-projection accumulator)
    """
    k = pl.program_id(1)

    @pl.when(k == 0)
    def _init():
        acc_ref[...] = jnp.zeros_like(acc_ref)

    # Image projection partial sum: bf16 MXU inputs, f32 accumulation.
    acc_ref[...] += jnp.dot(img_ref[...].astype(jnp.bfloat16), w_img_ref[...],
                            preferred_element_type=jnp.float32)

    @pl.when(k == pl.num_programs(1) - 1)
    def _epilogue():
        img_emb = acc_ref[...] + b_img_ref[...]            # f32 bias epilogue (v5e-safe)
        # Similarity logits: contract the embedding dims directly (no materialized .T).
        out_ref[...] = lax.dot_general(
            img_emb.astype(jnp.bfloat16), txt_ref[...],
            dimension_numbers=(((1,), (1,)), ((), ())),
            preferred_element_type=jnp.float32)


def _clip_fused_kernel(img_ref, w_eff_ref, b_eff_ref, out_ref, acc_ref):
    """Fused path (valid whenever B_txt <= EMBED_DIM): single K-tiled matmul + bias.

    img_ref  : [tm, tk]     f32
    w_eff_ref: [tk, Bt_pad] bf16  (w_img @ txt_emb.T, built once in the glue)
    b_eff_ref: [1, Bt_pad]  f32
    out_ref  : [tm, Bt_pad] f32
    acc_ref  : [tm, Bt_pad] f32 VMEM scratch
    """
    k = pl.program_id(1)

    @pl.when(k == 0)
    def _init():
        acc_ref[...] = jnp.zeros_like(acc_ref)

    acc_ref[...] += jnp.dot(img_ref[...].astype(jnp.bfloat16), w_eff_ref[...],
                            preferred_element_type=jnp.float32)

    @pl.when(k == pl.num_programs(1) - 1)
    def _epilogue():
        out_ref[...] = acc_ref[...] + b_eff_ref[...]


# ----------------------------------------------------------------------------- tiling
def _pick_tk(F, cap=2048):
    """Largest K tile (multiple of 128, <= cap) that divides F exactly.

    Exact division keeps every K block fully in-bounds so no garbage feature columns ever
    reach the accumulator (the image features are fed unpadded).  Falls back to a single
    resident K block (block dim == full array dim is always legal)."""
    if F % 128 == 0:
        for cand in range(min(F, cap), 127, -128):
            if F % cand == 0:
                return cand
    return F


def _pick_tm(B_img, tk, w_cols, n_cols, vmem_budget):
    """Largest image-batch tile (multiple of 8, <= 512) whose total resident VMEM footprint
    (double-buffered img/weight/bias/txt tiles + f32 out tile + f32 accumulator) fits."""
    fixed = (2 * (tk * w_cols * 2)          # weight K-tile, bf16, double-buffered
             + 2 * (w_cols * 4)             # bias, f32, double-buffered
             + 2 * (n_cols * w_cols * 2))   # resident txt operand (over-counts fused path)
    per_row = (2 * (tk * 4)                 # f32 image K-tile, double-buffered
               + 2 * (n_cols * 4)           # f32 out tile, double-buffered
               + w_cols * 4)                # f32 accumulator scratch
    tm = max(8, ((vmem_budget - fixed) // per_row) // 8 * 8)
    tm = min(tm, 512, _round_up(B_img, 8))
    # Megacore: prefer >= 2 image tiles so both v7x TensorCores get work when possible.
    if B_img > 8 and pl.cdiv(B_img, tm) < 2:
        tm = max(8, _round_up(pl.cdiv(B_img, 2), 8))
    return tm


# ----------------------------------------------------------------------------- wrapper
def clip_forward(img_x, text_x, params, *, fuse_text=None,
                 vmem_limit_bytes=48 * 1024 * 1024):
    """img_x: [B, C, H, W] float32 (NCHW); text_x: [B_t, T] int32 token ids."""
    B_img = img_x.shape[0]
    img_feat = img_x.reshape(B_img, -1).astype(jnp.float32)   # [B, F], fed straight to kernel
    F = img_feat.shape[1]

    # ---- glue: text encoder (embedding gather + mean pool + tiny [32,32] projection) ----
    tok_emb = params["emb_table"][text_x]                     # [B_t, T, TXT_DIM]
    txt_feat = jnp.mean(tok_emb, axis=1)                      # [B_t, TXT_DIM]
    txt_emb = txt_feat @ params["w_txt"] + params["b_txt"]    # [B_t, D] f32
    B_txt, D = txt_emb.shape

    if fuse_text is None:
        fuse_text = B_txt <= D            # fewer FLOPs + no second MXU pass when true

    D_pad = _round_up(D, 128)
    Bt_pad = _round_up(B_txt, 128)
    tk = _pick_tk(F)
    budget = vmem_limit_bytes // 2        # headroom for Mosaic internals / semaphores

    compiler_params = pltpu.CompilerParams(
        dimension_semantics=("parallel", "arbitrary"),
        vmem_limit_bytes=vmem_limit_bytes,
    )

    if fuse_text:
        # Fold the text side into an effective weight (exact in f32, cast once to bf16).
        w_eff = params["w_img"].astype(jnp.float32) @ txt_emb.T     # [F, B_txt]
        b_eff = params["b_img"].astype(jnp.float32) @ txt_emb.T     # [1, B_txt]
        w_eff_p = jnp.zeros((F, Bt_pad), jnp.bfloat16).at[:, :B_txt].set(
            w_eff.astype(jnp.bfloat16))
        b_eff_p = jnp.zeros((1, Bt_pad), jnp.float32).at[:, :B_txt].set(b_eff)

        tm = _pick_tm(B_img, tk, Bt_pad, Bt_pad, budget)
        grid = (pl.cdiv(B_img, tm), F // tk)
        cost = pl.CostEstimate(
            flops=2 * B_img * F * Bt_pad, transcendentals=0,
            bytes_accessed=B_img * F * 4 + F * Bt_pad * 2 + B_img * Bt_pad * 4)

        out = pl.pallas_call(
            _clip_fused_kernel,
            out_shape=jax.ShapeDtypeStruct((B_img, Bt_pad), jnp.float32),
            grid=grid,
            in_specs=[
                pl.BlockSpec((tm, tk), lambda m, k: (m, k)),       # image features (f32)
                pl.BlockSpec((tk, Bt_pad), lambda m, k: (k, 0)),   # fused weight: K-tiled
                pl.BlockSpec((1, Bt_pad), lambda m, k: (0, 0)),    # fused bias: resident
            ],
            out_specs=pl.BlockSpec((tm, Bt_pad), lambda m, k: (m, 0)),
            scratch_shapes=[pltpu.VMEM((tm, Bt_pad), jnp.float32)],
            compiler_params=compiler_params,
            cost_estimate=cost,
        )(img_feat, w_eff_p, b_eff_p)
    else:
        # General two-matmul path (real CLIP: B_txt >> EMBED_DIM). Pad only the small
        # operands; image features stay unpadded f32 in HBM.
        w_img_p = jnp.zeros((F, D_pad), jnp.bfloat16).at[:, :D].set(
            params["w_img"].astype(jnp.bfloat16))
        b_img_p = jnp.zeros((1, D_pad), jnp.float32).at[:, :D].set(
            params["b_img"].astype(jnp.float32))
        txt_emb_p = jnp.zeros((Bt_pad, D_pad), jnp.bfloat16).at[:B_txt, :D].set(
            txt_emb.astype(jnp.bfloat16))

        tm = _pick_tm(B_img, tk, D_pad, Bt_pad, budget)
        grid = (pl.cdiv(B_img, tm), F // tk)
        cost = pl.CostEstimate(
            flops=2 * B_img * F * D + 2 * B_img * D * B_txt, transcendentals=0,
            bytes_accessed=(B_img * F * 4 + F * D_pad * 2 + Bt_pad * D_pad * 2
                            + B_img * Bt_pad * 4))

        out = pl.pallas_call(
            _clip_general_kernel,
            out_shape=jax.ShapeDtypeStruct((B_img, Bt_pad), jnp.float32),
            grid=grid,
            in_specs=[
                pl.BlockSpec((tm, tk), lambda m, k: (m, k)),        # image features (f32)
                pl.BlockSpec((tk, D_pad), lambda m, k: (k, 0)),     # image weight: K-tiled
                pl.BlockSpec((1, D_pad), lambda m, k: (0, 0)),      # image bias: resident
                pl.BlockSpec((Bt_pad, D_pad), lambda m, k: (0, 0)), # text emb: resident
            ],
            out_specs=pl.BlockSpec((tm, Bt_pad), lambda m, k: (m, 0)),
            scratch_shapes=[pltpu.VMEM((tm, D_pad), jnp.float32)],
            compiler_params=compiler_params,
            cost_estimate=cost,
        )(img_feat, w_img_p, b_img_p, txt_emb_p)

    return out[:B_img, :B_txt]


# ----------------------------------------------------------------------------- params / ref
def init_params(key, img_feat_dim):
    k1, k2, k3 = jax.random.split(key, 3)
    return {
        "w_img": jax.random.normal(k1, (img_feat_dim, EMBED_DIM), jnp.float32) * 0.02,
        "b_img": jnp.zeros((1, EMBED_DIM), jnp.float32),
        "w_txt": jax.random.normal(k2, (TXT_DIM, EMBED_DIM), jnp.float32) * 0.02,
        "b_txt": jnp.zeros((1, EMBED_DIM), jnp.float32),
        "emb_table": jax.random.normal(k3, (VOCAB, TXT_DIM), jnp.float32) * 0.02,
    }


def clip_reference(img_x, text_x, params):
    B_img = img_x.shape[0]
    img_feat = img_x.reshape(B_img, -1).astype(jnp.float32)
    img_emb = img_feat @ params["w_img"] + params["b_img"]
    txt_feat = jnp.mean(params["emb_table"][text_x], axis=1)
    txt_emb = txt_feat @ params["w_txt"] + params["b_txt"]
    return img_emb @ txt_emb.T


if __name__ == "__main__":
    key = jax.random.PRNGKey(0)
    k_img, k_txt, k_param = jax.random.split(key, 3)

    B, C, H, W = 2, 4, 16, 16       # image batch, NCHW
    B_t, T = 2, 8                   # text batch, sequence length

    img_x = jax.random.normal(k_img, (B, C, H, W), jnp.float32)
    text_x = jax.random.randint(k_txt, (B_t, T), 0, VOCAB, jnp.int32)
    params = init_params(k_param, C * H * W)

    ref = clip_reference(img_x, text_x, params)

    # Default path for this toy (B_txt <= EMBED_DIM): fused effective-weight kernel.
    out_fused = jax.block_until_ready(clip_forward(img_x, text_x, params))
    assert out_fused.shape == (B, B_t), out_fused.shape
    assert jnp.allclose(out_fused, ref, atol=1e-3, rtol=2e-2), "fused path mismatch"

    # General two-matmul path (what real CLIP with B_txt >> EMBED_DIM would run).
    out_general = jax.block_until_ready(
        clip_forward(img_x, text_x, params, fuse_text=False))
    assert out_general.shape == (B, B_t), out_general.shape
    assert jnp.allclose(out_general, ref, atol=1e-3, rtol=2e-2), "general path mismatch"

    print("KERNEL_OK")
</pallas_src>

<mosaic_0001>
module attributes {stable_mosaic.version = 11 : i64} {
  func.func @_clip_fused_kernel(%arg0: i32, %arg1: i32, %arg2: memref<8x1024xf32, #tpu.memory_space<vmem>>, %arg3: memref<1024x128xbf16, #tpu.memory_space<vmem>>, %arg4: memref<1x128xf32, #tpu.memory_space<vmem>>, %arg5: memref<8x128xf32, #tpu.memory_space<vmem>>, %arg6: memref<8x128xf32, #tpu.memory_space<vmem>>) attributes {dimension_semantics = [#tpu.dimension_semantics<parallel>, #tpu.dimension_semantics<arbitrary>], iteration_bounds = array<i64: 1, 1>, scalar_prefetch = 0 : i64, scratch_operands = 1 : i64, tpu.core_type = #tpu.core_type<tc>, window_params = [{transform_indices = @transform_0, window_bounds = array<i64: 8, 1024>}, {transform_indices = @transform_1, window_bounds = array<i64: 1024, 128>}, {pipeline_mode = #tpu.pipeline_mode<synchronous>, transform_indices = @transform_2, window_bounds = array<i64: 1, 128>}, {transform_indices = @transform_3, window_bounds = array<i64: 8, 128>}]} {
    %c0_i32 = arith.constant 0 : i32
    %0 = arith.cmpi eq, %arg1, %c0_i32 : i32
    %1 = arith.extui %0 : i1 to i32
    %c0_i32_0 = arith.constant 0 : i32
    %2 = arith.cmpi ne, %1, %c0_i32_0 : i32
    scf.if %2 {
      %cst_10 = arith.constant 0.000000e+00 : f32
      %13 = vector.broadcast %cst_10 : f32 to vector<8x128xf32>
      %c0_11 = arith.constant 0 : index
      %c0_12 = arith.constant 0 : index
      %14 = vector.load %arg6[%c0_11, %c0_12] : memref<8x128xf32, #tpu.memory_space<vmem>>, vector<8x128xf32>
      tpu.vector_store %arg6[%c0_11, %c0_12], %13 {strides = array<i32>} : memref<8x128xf32, #tpu.memory_space<vmem>>, vector<8x128xf32>,
    } else {
    }
    %c0 = arith.constant 0 : index
    %c0_1 = arith.constant 0 : index
    %3 = vector.load %arg6[%c0, %c0_1] : memref<8x128xf32, #tpu.memory_space<vmem>>, vector<8x128xf32>
    %c0_2 = arith.constant 0 : index
    %c0_3 = arith.constant 0 : index
    %4 = vector.load %arg2[%c0_2, %c0_3] : memref<8x1024xf32, #tpu.memory_space<vmem>>, vector<8x1024xf32>
    %5 = arith.truncf %4 : vector<8x1024xf32> to vector<8x1024xbf16>
    %c0_4 = arith.constant 0 : index
    %c0_5 = arith.constant 0 : index
    %6 = vector.load %arg3[%c0_4, %c0_5] : memref<1024x128xbf16, #tpu.memory_space<vmem>>, vector<1024x128xbf16>
    %cst = arith.constant dense<0.000000e+00> : vector<8x128xf32>
    %7 = tpu.matmul %5, %6, %cst {dimension_numbers = #tpu.dot_dimension_numbers<[1], [0], [0], [1], [0, 0, 1, 1], [], []>} : vector<8x1024xbf16>, vector<1024x128xbf16>, vector<8x128xf32> -> vector<8x128xf32>
    %8 = arith.addf %3, %7 : vector<8x128xf32>
    %c0_6 = arith.constant 0 : index
    %c0_7 = arith.constant 0 : index
    %9 = vector.load %arg6[%c0_6, %c0_7] : memref<8x128xf32, #tpu.memory_space<vmem>>, vector<8x128xf32>
    tpu.vector_store %arg6[%c0_6, %c0_7], %8 {strides = array<i32>} : memref<8x128xf32, #tpu.memory_space<vmem>>, vector<8x128xf32>,
    %c0_i32_8 = arith.constant 0 : i32
    %10 = arith.cmpi eq, %arg1, %c0_i32_8 : i32
    %11 = arith.extui %10 : i1 to i32
    %c0_i32_9 = arith.constant 0 : i32
    %12 = arith.cmpi ne, %11, %c0_i32_9 : i32
    scf.if %12 {
      %c0_10 = arith.constant 0 : index
      %c0_11 = arith.constant 0 : index
      %13 = vector.load %arg6[%c0_10, %c0_11] : memref<8x128xf32, #tpu.memory_space<vmem>>, vector<8x128xf32>
      %c0_12 = arith.constant 0 : index
      %c0_13 = arith.constant 0 : index
      %14 = vector.load %arg4[%c0_12, %c0_13] : memref<1x128xf32, #tpu.memory_space<vmem>>, vector<1x128xf32>
      %15 = vector.broadcast %14 : vector<1x128xf32> to vector<8x128xf32>
      %16 = arith.addf %13, %15 : vector<8x128xf32>
      %c0_14 = arith.constant 0 : index
      %c0_15 = arith.constant 0 : index
      %17 = vector.load %arg5[%c0_14, %c0_15] : memref<8x128xf32, #tpu.memory_space<vmem>>, vector<8x128xf32>
      tpu.vector_store %arg5[%c0_14, %c0_15], %16 {strides = array<i32>} : memref<8x128xf32, #tpu.memory_space<vmem>>, vector<8x128xf32>,
    } else {
    }
    return
  }
  func.func @transform_0(%arg0: i32, %arg1: i32) -> (i32, i32) {
    %c0_i32 = arith.constant 0 : i32
    return %arg0, %arg1 : i32, i32
  }
  func.func @transform_1(%arg0: i32, %arg1: i32) -> (i32, i32) {
    %c0_i32 = arith.constant 0 : i32
    %c0_i32_0 = arith.constant 0 : i32
    return %arg1, %c0_i32 : i32, i32
  }
  func.func @transform_2(%arg0: i32, %arg1: i32) -> (i32, i32) {
    %c0_i32 = arith.constant 0 : i32
    %c0_i32_0 = arith.constant 0 : i32
    %c0_i32_1 = arith.constant 0 : i32
    return %c0_i32, %c0_i32_0 : i32, i32
  }
  func.func @transform_3(%arg0: i32, %arg1: i32) -> (i32, i32) {
    %c0_i32 = arith.constant 0 : i32
    %c0_i32_0 = arith.constant 0 : i32
    return %arg0, %c0_i32 : i32, i32
  }
}

</mosaic_0001>

<llo_original>
// kernel: tpu_custom_call.1
$region0: #{tpu_custom_call.1}
  #allocation0 [shape = 'u32[]', space=smem, size = 0x4, offset = 0x4, fixed_abs, tag = 'smem constant byte address 0x4 - core index']
  #allocation1 [shape = 'u32[144,128]{1,0:T(1,128)}', space=vmem, size = 0x12000, scoped, tag = 'internal scratch']
  #allocation2 [shape = 'f32[8,128]{1,0:T(8,128)}', space=vmem, size = 0x1000, scoped, tag = 'scratch operand']
  %s0 = inlined_call_operand.hbm [shape: f32[2,1024], index: 0, kind: input, shape index: {}]
  %s1 = inlined_call_operand.hbm [shape: bf16[1024,128], index: 1, kind: input, shape index: {}]
  %s2 = inlined_call_operand.vmem [shape: f32[1,128], index: 2, kind: input, shape index: {}]
  %s3 = inlined_call_operand.hbm [shape: f32[2,128], index: 3, kind: output, shape index: {}]
  %s4 = sld [smem:[#allocation0]]
  $region38: #{tpu_custom_call.1} parent=0
    _
  %s6 = ssub.s32 1, %s4
  %s7 = scalar_select 0, %s6, %s4
  $region1: #{tpu_custom_call.1} parent=0
    #allocation3 [shape = 'u8[32768]{0}', space=vmem, size = 0x8000, scoped, tag = 'input window, operand 0, single buffered']
    #allocation4 [shape = 's32[1]{0}', space=sflag, size = 0x4, scoped, tag = 'scoped memory for tpu_custom_call.1']
    #allocation5 [shape = 's32[1]{0}', space=sflag, size = 0x4, scoped, tag = 'scoped memory for tpu_custom_call.1']
    #allocation6 [shape = 'u8[262144]{0}', space=vmem, size = 0x40000, scoped, tag = 'input window, operand 1, single buffered']
    #allocation7 [shape = 's32[1]{0}', space=sflag, size = 0x4, scoped, tag = 'scoped memory for tpu_custom_call.1']
    #allocation8 [shape = 'u8[4096]{0}', space=vmem, size = 0x1000, scoped, tag = 'output window, operand 0, single buffered']
    %8 = vsyncpa [#allocation4], 0
    %9 = vsyncpa [#allocation7], 0
    %10 = vsyncpa [#allocation5], 0
    // Predicated region
    $region2: #{tpu_custom_call.1} parent=1 // pred_check
      _
    $region3: #{tpu_custom_call.1} parent=1 // pred_check_branch
      %12 = sbr.rel (0) target = $region5
    $region4: #{tpu_custom_call.1} parent=1 // pred_region
      %s14 = ssub.s32 1024, 256
      %15 = vsyncadd [#allocation4], %s14
      %s16 = sshll.u32 [#allocation3], 4
      %s17 = int_to_ptr.vmem [resolvable:$true] %s16
      %22 = dma.hbm_to_vmem [thread:$0]  %s0, 256, %s17, [#allocation4], 256, 256, 16
    $region5: #{tpu_custom_call.1} parent=1 // pred_fallthru
      _
    // Predicated region
    $region6: #{tpu_custom_call.1} parent=1 // pred_check
      _
    $region7: #{tpu_custom_call.1} parent=1 // pred_check_branch
      %24 = sbr.rel (0) target = $region9
    $region8: #{tpu_custom_call.1} parent=1 // pred_region
      %s26 = ssub.s32 8192, 8192
      %27 = vsyncadd [#allocation7], %s26
      %s28 = sshll.u32 [#allocation6], 4
      %s29 = int_to_ptr.vmem [resolvable:$true] %s28
      %34 = dma.hbm_to_vmem [thread:$0]  %s1, 8192, %s29, [#allocation7], 64, 64, 4
    $region9: #{tpu_custom_call.1} parent=1 // pred_fallthru
      _
    // Predicated region
    $region10: #{tpu_custom_call.1} parent=1 // pred_check
      _
    $region11: #{tpu_custom_call.1} parent=1 // pred_check_branch
      %36 = sbr.rel (0) target = $region13
    $region12: #{tpu_custom_call.1} parent=1 // pred_region
      _
    $region13: #{tpu_custom_call.1} parent=1 // pred_fallthru
      _
    // Predicated region
    $region14: #{tpu_custom_call.1} parent=1 // pred_check
      _
    $region15: #{tpu_custom_call.1} parent=1 // pred_check_branch
      %38 = sbr.rel (0) target = $region17
    $region16: #{tpu_custom_call.1} parent=1 // pred_region
      %39 = dma.done [#allocation4], 1024
    $region17: #{tpu_custom_call.1} parent=1 // pred_fallthru
      _
    // Predicated region
    $region18: #{tpu_custom_call.1} parent=1 // pred_check
      _
    $region19: #{tpu_custom_call.1} parent=1 // pred_check_branch
      %41 = sbr.rel (0) target = $region21
    $region20: #{tpu_custom_call.1} parent=1 // pred_region
      %42 = dma.done [#allocation7], 8192
    $region21: #{tpu_custom_call.1} parent=1 // pred_fallthru
      _
    %p44 = scmp.eq.s32.totalorder 0, 0
    // Predicated region
    $region22: #{tpu_custom_call.1} parent=1 // pred_check
      %p45 = pneg %p44
    $region23: #{tpu_custom_call.1} parent=1 // pred_check_branch
      %47 = sbr.rel (%p45) target = $region25
    $region24: #{tpu_custom_call.1} parent=1 // pred_region
      %48 = vst [vmem:[#allocation2] sm:$0xff] 0.0
    $region25: #{tpu_custom_call.1} parent=1 // pred_fallthru
      _
    %v49 = vld [vmem:[#allocation2] sm:$0xff]
    %v50 = vld [vmem:[#allocation3] sm:$0xff]
    %v51 = vld [vmem:[#allocation3 + $0x8] sm:$0xff]
    %v52 = vld [vmem:[#allocation3 + $0x10] sm:$0xff]
    %v53 = vld [vmem:[#allocation3 + $0x18] sm:$0xff]
    %v54 = vld [vmem:[#allocation3 + $0x20] sm:$0xff]
    %v55 = vld [vmem:[#allocation3 + $0x28] sm:$0xff]
    %v56 = vld [vmem:[#allocation3 + $0x30] sm:$0xff]
    %v57 = vld [vmem:[#allocation3 + $0x38] sm:$0xff]
    %v66 = vcombine.low %v50, %v52
    %v67 = vcombine.high %v50, %v52
    %v68 = vcombine.low %v54, %v56
    %v69 = vcombine.high %v54, %v56
    %v71 = vunpack.c.l.s4 1983009808
    %v72 = vunpack.c.0.s8 %v71
    %v73 = vlaneseq
    %v74 = vshrl.u32 %v73, 7
    %v75 = vsub.s32 %v72, %v74
    %v76 = vrot.slane %v66, %v75
    %v78 = vunpack.c.l.s4 1983009808
    %v79 = vunpack.c.0.s8 %v78
    %v80 = vlaneseq
    %v81 = vshrl.u32 %v80, 7
    %v82 = vsub.s32 %v79, %v81
    %v83 = vrot.slane %v67, %v82
    %v85 = vunpack.c.l.s4 1983009808
    %v86 = vunpack.c.0.s8 %v85
    %v87 = vlaneseq
    %v88 = vshrl.u32 %v87, 7
    %v89 = vsub.s32 %v86, %v88
    %v90 = vrot.slane %v68, %v89
    %v92 = vunpack.c.l.s4 1983009808
    %v93 = vunpack.c.0.s8 %v92
    %v94 = vlaneseq
    %v95 = vshrl.u32 %v94, 7
    %v96 = vsub.s32 %v93, %v95
    %v97 = vrot.slane %v69, %v96
    %v98 = vcombine.low %v76, %v90
    %v99 = vcombine.high %v76, %v90
    %v100 = vcombine.low %v83, %v97
    %v101 = vcombine.high %v83, %v97
    %v102 = vcombine.low %v51, %v53
    %v103 = vcombine.high %v51, %v53
    %v104 = vcombine.low %v55, %v57
    %v105 = vcombine.high %v55, %v57
    %v107 = vunpack.c.l.s4 1983009808
    %v108 = vunpack.c.0.s8 %v107
    %v109 = vlaneseq
    %v110 = vshrl.u32 %v109, 7
    %v111 = vsub.s32 %v108, %v110
    %v112 = vrot.slane %v102, %v111
    %v114 = vunpack.c.l.s4 1983009808
    %v115 = vunpack.c.0.s8 %v114
    %v116 = vlaneseq
    %v117 = vshrl.u32 %v116, 7
    %v118 = vsub.s32 %v115, %v117
    %v119 = vrot.slane %v103, %v118
    %v121 = vunpack.c.l.s4 1983009808
    %v122 = vunpack.c.0.s8 %v121
    %v123 = vlaneseq
    %v124 = vshrl.u32 %v123, 7
    %v125 = vsub.s32 %v122, %v124
    %v126 = vrot.slane %v104, %v125
    %v128 = vunpack.c.l.s4 1983009808
    %v129 = vunpack.c.0.s8 %v128
    %v130 = vlaneseq
    %v131 = vshrl.u32 %v130, 7
    %v132 = vsub.s32 %v129, %v131
    %v133 = vrot.slane %v105, %v132
    %v134 = vcombine.low %v112, %v126
    %v135 = vcombine.high %v112, %v126
    %v136 = vcombine.low %v119, %v133
    %v137 = vcombine.high %v119, %v133
    %v146 = vpack.c.bf16 %v98, %v98
    %v147 = vpack.c.bf16 %v99, %v99
    %v148 = vpack.c.bf16 %v100, %v100
    %v149 = vpack.c.bf16 %v101, %v101
    %v150 = vpack.c.bf16 %v134, %v134
    %v151 = vpack.c.bf16 %v135, %v135
    %v152 = vpack.c.bf16 %v136, %v136
    %v153 = vpack.c.bf16 %v137, %v137
    %v154 = vld [vmem:[#allocation6] sm:$0xf]
    %v155 = vld [vmem:[#allocation6 + $0x4] sm:$0xf]
    %v156 = vld [vmem:[#allocation6 + $0x8] sm:$0xf]
    %v157 = vld [vmem:[#allocation6 + $0xc] sm:$0xf]
    %v158 = vld [vmem:[#allocation6 + $0x10] sm:$0xf]
    %v159 = vld [vmem:[#allocation6 + $0x14] sm:$0xf]
    %v160 = vld [vmem:[#allocation6 + $0x18] sm:$0xf]
    %v161 = vld [vmem:[#allocation6 + $0x1c] sm:$0xf]
    %v162 = vld [vmem:[#allocation6 + $0x20] sm:$0xf]
    %v163 = vld [vmem:[#allocation6 + $0x24] sm:$0xf]
    %v164 = vld [vmem:[#allocation6 + $0x28] sm:$0xf]
    %v165 = vld [vmem:[#allocation6 + $0x2c] sm:$0xf]
    %v166 = vld [vmem:[#allocation6 + $0x30] sm:$0xf]
    %v167 = vld [vmem:[#allocation6 + $0x34] sm:$0xf]
    %v168 = vld [vmem:[#allocation6 + $0x38] sm:$0xf]
    %v169 = vld [vmem:[#allocation6 + $0x3c] sm:$0xf]
    %v170 = vld [vmem:[#allocation6 + $0x40] sm:$0xf]
    %v171 = vld [vmem:[#allocation6 + $0x44] sm:$0xf]
    %v172 = vld [vmem:[#allocation6 + $0x48] sm:$0xf]
    %v173 = vld [vmem:[#allocation6 + $0x4c] sm:$0xf]
    %v174 = vld [vmem:[#allocation6 + $0x50] sm:$0xf]
    %v175 = vld [vmem:[#allocation6 + $0x54] sm:$0xf]
    %v176 = vld [vmem:[#allocation6 + $0x58] sm:$0xf]
    %v177 = vld [vmem:[#allocation6 + $0x5c] sm:$0xf]
    %v178 = vld [vmem:[#allocation6 + $0x60] sm:$0xf]
    %v179 = vld [vmem:[#allocation6 + $0x64] sm:$0xf]
    %v180 = vld [vmem:[#allocation6 + $0x68] sm:$0xf]
    %v181 = vld [vmem:[#allocation6 + $0x6c] sm:$0xf]
    %v182 = vld [vmem:[#allocation6 + $0x70] sm:$0xf]
    %v183 = vld [vmem:[#allocation6 + $0x74] sm:$0xf]
    %v184 = vld [vmem:[#allocation6 + $0x78] sm:$0xf]
    %v185 = vld [vmem:[#allocation6 + $0x7c] sm:$0xf]
    %v186 = vld [vmem:[#allocation6 + $0x80] sm:$0xf]
    %v187 = vld [vmem:[#allocation6 + $0x84] sm:$0xf]
    %v188 = vld [vmem:[#allocation6 + $0x88] sm:$0xf]
    %v189 = vld [vmem:[#allocation6 + $0x8c] sm:$0xf]
    %v190 = vld [vmem:[#allocation6 + $0x90] sm:$0xf]
    %v191 = vld [vmem:[#allocation6 + $0x94] sm:$0xf]
    %v192 = vld [vmem:[#allocation6 + $0x98] sm:$0xf]
    %v193 = vld [vmem:[#allocation6 + $0x9c] sm:$0xf]
    %v194 = vld [vmem:[#allocation6 + $0xa0] sm:$0xf]
    %v195 = vld [vmem:[#allocation6 + $0xa4] sm:$0xf]
    %v196 = vld [vmem:[#allocation6 + $0xa8] sm:$0xf]
    %v197 = vld [vmem:[#allocation6 + $0xac] sm:$0xf]
    %v198 = vld [vmem:[#allocation6 + $0xb0] sm:$0xf]
    %v199 = vld [vmem:[#allocation6 + $0xb4] sm:$0xf]
    %v200 = vld [vmem:[#allocation6 + $0xb8] sm:$0xf]
    %v201 = vld [vmem:[#allocation6 + $0xbc] sm:$0xf]
    %v202 = vld [vmem:[#allocation6 + $0xc0] sm:$0xf]
    %v203 = vld [vmem:[#allocation6 + $0xc4] sm:$0xf]
    %v204 = vld [vmem:[#allocation6 + $0xc8] sm:$0xf]
    %v205 = vld [vmem:[#allocation6 + $0xcc] sm:$0xf]
    %v206 = vld [vmem:[#allocation6 + $0xd0] sm:$0xf]
    %v207 = vld [vmem:[#allocation6 + $0xd4] sm:$0xf]
    %v208 = vld [vmem:[#allocation6 + $0xd8] sm:$0xf]
    %v209 = vld [vmem:[#allocation6 + $0xdc] sm:$0xf]
    %v210 = vld [vmem:[#allocation6 + $0xe0] sm:$0xf]
    %v211 = vld [vmem:[#allocation6 + $0xe4] sm:$0xf]
    %v212 = vld [vmem:[#allocation6 + $0xe8] sm:$0xf]
    %v213 = vld [vmem:[#allocation6 + $0xec] sm:$0xf]
    %v214 = vld [vmem:[#allocation6 + $0xf0] sm:$0xf]
    %v215 = vld [vmem:[#allocation6 + $0xf4] sm:$0xf]
    %v216 = vld [vmem:[#allocation6 + $0xf8] sm:$0xf]
    %v217 = vld [vmem:[#allocation6 + $0xfc] sm:$0xf]
    %v218 = vld [vmem:[#allocation6 + $0x100] sm:$0xf]
    %v219 = vld [vmem:[#allocation6 + $0x104] sm:$0xf]
    %v220 = vld [vmem:[#allocation6 + $0x108] sm:$0xf]
    %v221 = vld [vmem:[#allocation6 + $0x10c] sm:$0xf]
    %v222 = vld [vmem:[#allocation6 + $0x110] sm:$0xf]
    %v223 = vld [vmem:[#allocation6 + $0x114] sm:$0xf]
    %v224 = vld [vmem:[#allocation6 + $0x118] sm:$0xf]
    %v225 = vld [vmem:[#allocation6 + $0x11c] sm:$0xf]
    %v226 = vld [vmem:[#allocation6 + $0x120] sm:$0xf]
    %v227 = vld [vmem:[#allocation6 + $0x124] sm:$0xf]
    %v228 = vld [vmem:[#allocation6 + $0x128] sm:$0xf]
    %v229 = vld [vmem:[#allocation6 + $0x12c] sm:$0xf]
    %v230 = vld [vmem:[#allocation6 + $0x130] sm:$0xf]
    %v231 = vld [vmem:[#allocation6 + $0x134] sm:$0xf]
    %v232 = vld [vmem:[#allocation6 + $0x138] sm:$0xf]
    %v233 = vld [vmem:[#allocation6 + $0x13c] sm:$0xf]
    %v234 = vld [vmem:[#allocation6 + $0x140] sm:$0xf]
    %v235 = vld [vmem:[#allocation6 + $0x144] sm:$0xf]
    %v236 = vld [vmem:[#allocation6 + $0x148] sm:$0xf]
    %v237 = vld [vmem:[#allocation6 + $0x14c] sm:$0xf]
    %v238 = vld [vmem:[#allocation6 + $0x150] sm:$0xf]
    %v239 = vld [vmem:[#allocation6 + $0x154] sm:$0xf]
    %v240 = vld [vmem:[#allocation6 + $0x158] sm:$0xf]
    %v241 = vld [vmem:[#allocation6 + $0x15c] sm:$0xf]
    %v242 = vld [vmem:[#allocation6 + $0x160] sm:$0xf]
    %v243 = vld [vmem:[#allocation6 + $0x164] sm:$0xf]
    %v244 = vld [vmem:[#allocation6 + $0x168] sm:$0xf]
    %v245 = vld [vmem:[#allocation6 + $0x16c] sm:$0xf]
    %v246 = vld [vmem:[#allocation6 + $0x170] sm:$0xf]
    %v247 = vld [vmem:[#allocation6 + $0x174] sm:$0xf]
    %v248 = vld [vmem:[#allocation6 + $0x178] sm:$0xf]
    %v249 = vld [vmem:[#allocation6 + $0x17c] sm:$0xf]
    %v250 = vld [vmem:[#allocation6 + $0x180] sm:$0xf]
    %v251 = vld [vmem:[#allocation6 + $0x184] sm:$0xf]
    %v252 = vld [vmem:[#allocation6 + $0x188] sm:$0xf]
    %v253 = vld [vmem:[#allocation6 + $0x18c] sm:$0xf]
    %v254 = vld [vmem:[#allocation6 + $0x190] sm:$0xf]
    %v255 = vld [vmem:[#allocation6 + $0x194] sm:$0xf]
    %v256 = vld [vmem:[#allocation6 + $0x198] sm:$0xf]
    %v257 = vld [vmem:[#allocation6 + $0x19c] sm:$0xf]
    %v258 = vld [vmem:[#allocation6 + $0x1a0] sm:$0xf]
    %v259 = vld [vmem:[#allocation6 + $0x1a4] sm:$0xf]
    %v260 = vld [vmem:[#allocation6 + $0x1a8] sm:$0xf]
    %v261 = vld [vmem:[#allocation6 + $0x1ac] sm:$0xf]
    %v262 = vld [vmem:[#allocation6 + $0x1b0] sm:$0xf]
    %v263 = vld [vmem:[#allocation6 + $0x1b4] sm:$0xf]
    %v264 = vld [vmem:[#allocation6 + $0x1b8] sm:$0xf]
    %v265 = vld [vmem:[#allocation6 + $0x1bc] sm:$0xf]
    %v266 = vld [vmem:[#allocation6 + $0x1c0] sm:$0xf]
    %v267 = vld [vmem:[#allocation6 + $0x1c4] sm:$0xf]
    %v268 = vld [vmem:[#allocation6 + $0x1c8] sm:$0xf]
    %v269 = vld [vmem:[#allocation6 + $0x1cc] sm:$0xf]
    %v270 = vld [vmem:[#allocation6 + $0x1d0] sm:$0xf]
    %v271 = vld [vmem:[#allocation6 + $0x1d4] sm:$0xf]
    %v272 = vld [vmem:[#allocation6 + $0x1d8] sm:$0xf]
    %v273 = vld [vmem:[#allocation6 + $0x1dc] sm:$0xf]
    %v274 = vld [vmem:[#allocation6 + $0x1e0] sm:$0xf]
    %v275 = vld [vmem:[#allocation6 + $0x1e4] sm:$0xf]
    %v276 = vld [vmem:[#allocation6 + $0x1e8] sm:$0xf]
    %v277 = vld [vmem:[#allocation6 + $0x1ec] sm:$0xf]
    %v278 = vld [vmem:[#allocation6 + $0x1f0] sm:$0xf]
    %v279 = vld [vmem:[#allocation6 + $0x1f4] sm:$0xf]
    %v280 = vld [vmem:[#allocation6 + $0x1f8] sm:$0xf]
    %v281 = vld [vmem:[#allocation6 + $0x1fc] sm:$0xf]
    %v410 = vunpack.c.l.b16 %v154
    %v411 = vunpack.c.l.b16 %v155
    %v412 = vunpack.c.l.b16 %v156
    %v413 = vunpack.c.l.b16 %v157
    %v414 = vunpack.c.l.b16 %v158
    %v415 = vunpack.c.l.b16 %v159
    %v416 = vunpack.c.l.b16 %v160
    %v417 = vunpack.c.l.b16 %v161
    %v418 = vunpack.c.l.b16 %v162
    %v419 = vunpack.c.l.b16 %v163
    %v420 = vunpack.c.l.b16 %v164
    %v421 = vunpack.c.l.b16 %v165
    %v422 = vunpack.c.l.b16 %v166
    %v423 = vunpack.c.l.b16 %v167
    %v424 = vunpack.c.l.b16 %v168
    %v425 = vunpack.c.l.b16 %v169
    %v426 = vunpack.c.l.b16 %v170
    %v427 = vunpack.c.l.b16 %v171
    %v428 = vunpack.c.l.b16 %v172
    %v429 = vunpack.c.l.b16 %v173
    %v430 = vunpack.c.l.b16 %v174
    %v431 = vunpack.c.l.b16 %v175
    %v432 = vunpack.c.l.b16 %v176
    %v433 = vunpack.c.l.b16 %v177
    %v434 = vunpack.c.l.b16 %v178
    %v435 = vunpack.c.l.b16 %v179
    %v436 = vunpack.c.l.b16 %v180
    %v437 = vunpack.c.l.b16 %v181
    %v438 = vunpack.c.l.b16 %v182
    %v439 = vunpack.c.l.b16 %v183
    %v440 = vunpack.c.l.b16 %v184
    %v441 = vunpack.c.l.b16 %v185
    %v442 = vunpack.c.l.b16 %v186
    %v443 = vunpack.c.l.b16 %v187
    %v444 = vunpack.c.l.b16 %v188
    %v445 = vunpack.c.l.b16 %v189
    %v446 = vunpack.c.l.b16 %v190
    %v447 = vunpack.c.l.b16 %v191
    %v448 = vunpack.c.l.b16 %v192
    %v449 = vunpack.c.l.b16 %v193
    %v450 = vunpack.c.l.b16 %v194
    %v451 = vunpack.c.l.b16 %v195
    %v452 = vunpack.c.l.b16 %v196
    %v453 = vunpack.c.l.b16 %v197
    %v454 = vunpack.c.l.b16 %v198
    %v455 = vunpack.c.l.b16 %v199
    %v456 = vunpack.c.l.b16 %v200
    %v457 = vunpack.c.l.b16 %v201
    %v458 = vunpack.c.l.b16 %v202
    %v459 = vunpack.c.l.b16 %v203
    %v460 = vunpack.c.l.b16 %v204
    %v461 = vunpack.c.l.b16 %v205
    %v462 = vunpack.c.l.b16 %v206
    %v463 = vunpack.c.l.b16 %v207
    %v464 = vunpack.c.l.b16 %v208
    %v465 = vunpack.c.l.b16 %v209
    %v466 = vunpack.c.l.b16 %v210
    %v467 = vunpack.c.l.b16 %v211
    %v468 = vunpack.c.l.b16 %v212
    %v469 = vunpack.c.l.b16 %v213
    %v470 = vunpack.c.l.b16 %v214
    %v471 = vunpack.c.l.b16 %v215
    %v472 = vunpack.c.l.b16 %v216
    %v473 = vunpack.c.l.b16 %v217
    %v474 = vunpack.c.l.b16 %v218
    %v475 = vunpack.c.l.b16 %v219
    %v476 = vunpack.c.l.b16 %v220
    %v477 = vunpack.c.l.b16 %v221
    %v478 = vunpack.c.l.b16 %v222
    %v479 = vunpack.c.l.b16 %v223
    %v480 = vunpack.c.l.b16 %v224
    %v481 = vunpack.c.l.b16 %v225
    %v482 = vunpack.c.l.b16 %v226
    %v483 = vunpack.c.l.b16 %v227
    %v484 = vunpack.c.l.b16 %v228
    %v485 = vunpack.c.l.b16 %v229
    %v486 = vunpack.c.l.b16 %v230
    %v487 = vunpack.c.l.b16 %v231
    %v488 = vunpack.c.l.b16 %v232
    %v489 = vunpack.c.l.b16 %v233
    %v490 = vunpack.c.l.b16 %v234
    %v491 = vunpack.c.l.b16 %v235
    %v492 = vunpack.c.l.b16 %v236
    %v493 = vunpack.c.l.b16 %v237
    %v494 = vunpack.c.l.b16 %v238
    %v495 = vunpack.c.l.b16 %v239
    %v496 = vunpack.c.l.b16 %v240
    %v497 = vunpack.c.l.b16 %v241
    %v498 = vunpack.c.l.b16 %v242
    %v499 = vunpack.c.l.b16 %v243
    %v500 = vunpack.c.l.b16 %v244
    %v501 = vunpack.c.l.b16 %v245
    %v502 = vunpack.c.l.b16 %v246
    %v503 = vunpack.c.l.b16 %v247
    %v504 = vunpack.c.l.b16 %v248
    %v505 = vunpack.c.l.b16 %v249
    %v506 = vunpack.c.l.b16 %v250
    %v507 = vunpack.c.l.b16 %v251
    %v508 = vunpack.c.l.b16 %v252
    %v509 = vunpack.c.l.b16 %v253
    %v510 = vunpack.c.l.b16 %v254
    %v511 = vunpack.c.l.b16 %v255
    %v512 = vunpack.c.l.b16 %v256
    %v513 = vunpack.c.l.b16 %v257
    %v514 = vunpack.c.l.b16 %v258
    %v515 = vunpack.c.l.b16 %v259
    %v516 = vunpack.c.l.b16 %v260
    %v517 = vunpack.c.l.b16 %v261
    %v518 = vunpack.c.l.b16 %v262
    %v519 = vunpack.c.l.b16 %v263
    %v520 = vunpack.c.l.b16 %v264
    %v521 = vunpack.c.l.b16 %v265
    %v522 = vunpack.c.l.b16 %v266
    %v523 = vunpack.c.l.b16 %v267
    %v524 = vunpack.c.l.b16 %v268
    %v525 = vunpack.c.l.b16 %v269
    %v526 = vunpack.c.l.b16 %v270
    %v527 = vunpack.c.l.b16 %v271
    %v528 = vunpack.c.l.b16 %v272
    %v529 = vunpack.c.l.b16 %v273
    %v530 = vunpack.c.l.b16 %v274
    %v531 = vunpack.c.l.b16 %v275
    %v532 = vunpack.c.l.b16 %v276
    %v533 = vunpack.c.l.b16 %v277
    %v534 = vunpack.c.l.b16 %v278
    %v535 = vunpack.c.l.b16 %v279
    %v536 = vunpack.c.l.b16 %v280
    %v537 = vunpack.c.l.b16 %v281
    %v538 = vpack.c.b16 %v411, %v410
    %v539 = vpack.c.b16 %v413, %v412
    %v540 = vpack.c.b16 %v415, %v414
    %v541 = vpack.c.b16 %v417, %v416
    %v542 = vpack.c.b16 %v419, %v418
    %v543 = vpack.c.b16 %v421, %v420
    %v544 = vpack.c.b16 %v423, %v422
    %v545 = vpack.c.b16 %v425, %v424
    %v546 = vpack.c.b16 %v427, %v426
    %v547 = vpack.c.b16 %v429, %v428
    %v548 = vpack.c.b16 %v431, %v430
    %v549 = vpack.c.b16 %v433, %v432
    %v550 = vpack.c.b16 %v435, %v434
    %v551 = vpack.c.b16 %v437, %v436
    %v552 = vpack.c.b16 %v439, %v438
    %v553 = vpack.c.b16 %v441, %v440
    %v554 = vpack.c.b16 %v443, %v442
    %v555 = vpack.c.b16 %v445, %v444
    %v556 = vpack.c.b16 %v447, %v446
    %v557 = vpack.c.b16 %v449, %v448
    %v558 = vpack.c.b16 %v451, %v450
    %v559 = vpack.c.b16 %v453, %v452
    %v560 = vpack.c.b16 %v455, %v454
    %v561 = vpack.c.b16 %v457, %v456
    %v562 = vpack.c.b16 %v459, %v458
    %v563 = vpack.c.b16 %v461, %v460
    %v564 = vpack.c.b16 %v463, %v462
    %v565 = vpack.c.b16 %v465, %v464
    %v566 = vpack.c.b16 %v467, %v466
    %v567 = vpack.c.b16 %v469, %v468
    %v568 = vpack.c.b16 %v471, %v470
    %v569 = vpack.c.b16 %v473, %v472
    %v570 = vpack.c.b16 %v475, %v474
    %v571 = vpack.c.b16 %v477, %v476
    %v572 = vpack.c.b16 %v479, %v478
    %v573 = vpack.c.b16 %v481, %v480
    %v574 = vpack.c.b16 %v483, %v482
    %v575 = vpack.c.b16 %v485, %v484
    %v576 = vpack.c.b16 %v487, %v486
    %v577 = vpack.c.b16 %v489, %v488
    %v578 = vpack.c.b16 %v491, %v490
    %v579 = vpack.c.b16 %v493, %v492
    %v580 = vpack.c.b16 %v495, %v494
    %v581 = vpack.c.b16 %v497, %v496
    %v582 = vpack.c.b16 %v499, %v498
    %v583 = vpack.c.b16 %v501, %v500
    %v584 = vpack.c.b16 %v503, %v502
    %v585 = vpack.c.b16 %v505, %v504
    %v586 = vpack.c.b16 %v507, %v506
    %v587 = vpack.c.b16 %v509, %v508
    %v588 = vpack.c.b16 %v511, %v510
    %v589 = vpack.c.b16 %v513, %v512
    %v590 = vpack.c.b16 %v515, %v514
    %v591 = vpack.c.b16 %v517, %v516
    %v592 = vpack.c.b16 %v519, %v518
    %v593 = vpack.c.b16 %v521, %v520
    %v594 = vpack.c.b16 %v523, %v522
    %v595 = vpack.c.b16 %v525, %v524
    %v596 = vpack.c.b16 %v527, %v526
    %v597 = vpack.c.b16 %v529, %v528
    %v598 = vpack.c.b16 %v531, %v530
    %v599 = vpack.c.b16 %v533, %v532
    %v600 = vpack.c.b16 %v535, %v534
    %v601 = vpack.c.b16 %v537, %v536
    %666 = vmatprep.subr.bf16.mxu0 0
    %667 = vmatpush1.bf16.msra.mxu0 %v545
    %668 = vmatprep.subr.bf16.mxu0 0
    %669 = vmatpush1.bf16.msra.mxu0 %v544
    %670 = vmatprep.subr.bf16.mxu0 0
    %671 = vmatpush1.bf16.msra.mxu0 %v543
    %672 = vmatprep.subr.bf16.mxu0 0
    %673 = vmatpush1.bf16.msra.mxu0 %v542
    %674 = vmatprep.subr.bf16.mxu0 0
    %675 = vmatpush1.bf16.msra.mxu0 %v541
    %676 = vmatprep.subr.bf16.mxu0 0
    %677 = vmatpush1.bf16.msra.mxu0 %v540
    %678 = vmatprep.subr.bf16.mxu0 0
    %679 = vmatpush1.bf16.msra.mxu0 %v539
    %680 = vmatprep.subr.bf16.mxu0 0
    %681 = vmatpush1.bf16.msra.mxu0 %v538
    %682 = vmatprep.subr.bf16.mxu0 0
    %683 = vmatpush2.bf16.msra.mxu0 %v553
    %684 = vmatprep.subr.bf16.mxu0 0
    %685 = vmatpush2.bf16.msra.mxu0 %v552
    %686 = vmatprep.subr.bf16.mxu0 0
    %687 = vmatpush2.bf16.msra.mxu0 %v551
    %688 = vmatprep.subr.bf16.mxu0 0
    %689 = vmatpush2.bf16.msra.mxu0 %v550
    %690 = vmatprep.subr.bf16.mxu0 0
    %691 = vmatpush2.bf16.msra.mxu0 %v549
    %692 = vmatprep.subr.bf16.mxu0 0
    %693 = vmatpush2.bf16.msra.mxu0 %v548
    %694 = vmatprep.subr.bf16.mxu0 0
    %695 = vmatpush2.bf16.msra.mxu0 %v547
    %696 = vmatprep.subr.bf16.mxu0 0
    %697 = vmatpush2.bf16.msra.mxu0 %v546
    %698 = vmatprep.mubr.bf16.mxu0 %v147
    %699 = vmatmul.mubr.bf16.gmra.mxu0 %v146
    %v700 = vpop.f32.mrf.mxu0
    %v701 = vadd.f32 0.0, %v700
    %v702 = vpop.f32.mrf.mxu0
    %v703 = vpop.f32.mrf.mxu0
    %v704 = vpop.f32.mrf.mxu0
    %705 = vdwg.mxu0
    %706 = vmatprep.subr.bf16.mxu0 0
    %707 = vmatpush1.bf16.msra.mxu0 %v561
    %708 = vmatprep.subr.bf16.mxu0 0
    %709 = vmatpush1.bf16.msra.mxu0 %v560
    %710 = vmatprep.subr.bf16.mxu0 0
    %711 = vmatpush1.bf16.msra.mxu0 %v559
    %712 = vmatprep.subr.bf16.mxu0 0
    %713 = vmatpush1.bf16.msra.mxu0 %v558
    %714 = vmatprep.subr.bf16.mxu0 0
    %715 = vmatpush1.bf16.msra.mxu0 %v557
    %716 = vmatprep.subr.bf16.mxu0 0
    %717 = vmatpush1.bf16.msra.mxu0 %v556
    %718 = vmatprep.subr.bf16.mxu0 0
    %719 = vmatpush1.bf16.msra.mxu0 %v555
    %720 = vmatprep.subr.bf16.mxu0 0
    %721 = vmatpush1.bf16.msra.mxu0 %v554
    %722 = vmatprep.subr.bf16.mxu0 0
    %723 = vmatpush2.bf16.msra.mxu0 %v569
    %724 = vmatprep.subr.bf16.mxu0 0
    %725 = vmatpush2.bf16.msra.mxu0 %v568
    %726 = vmatprep.subr.bf16.mxu0 0
    %727 = vmatpush2.bf16.msra.mxu0 %v567
    %728 = vmatprep.subr.bf16.mxu0 0
    %729 = vmatpush2.bf16.msra.mxu0 %v566
    %730 = vmatprep.subr.bf16.mxu0 0
    %731 = vmatpush2.bf16.msra.mxu0 %v565
    %732 = vmatprep.subr.bf16.mxu0 0
    %733 = vmatpush2.bf16.msra.mxu0 %v564
    %734 = vmatprep.subr.bf16.mxu0 0
    %735 = vmatpush2.bf16.msra.mxu0 %v563
    %736 = vmatprep.subr.bf16.mxu0 0
    %737 = vmatpush2.bf16.msra.mxu0 %v562
    %738 = vmatprep.mubr.bf16.mxu0 %v149
    %739 = vmatmul.mubr.bf16.gmra.mxu0 %v148
    %v740 = vpop.f32.mrf.mxu0
    %v741 = vadd.f32 %v701, %v740
    %v742 = vpop.f32.mrf.mxu0
    %v743 = vpop.f32.mrf.mxu0
    %v744 = vpop.f32.mrf.mxu0
    %745 = vdwg.mxu0
    %746 = vmatprep.subr.bf16.mxu0 0
    %747 = vmatpush1.bf16.msra.mxu0 %v577
    %748 = vmatprep.subr.bf16.mxu0 0
    %749 = vmatpush1.bf16.msra.mxu0 %v576
    %750 = vmatprep.subr.bf16.mxu0 0
    %751 = vmatpush1.bf16.msra.mxu0 %v575
    %752 = vmatprep.subr.bf16.mxu0 0
    %753 = vmatpush1.bf16.msra.mxu0 %v574
    %754 = vmatprep.subr.bf16.mxu0 0
    %755 = vmatpush1.bf16.msra.mxu0 %v573
    %756 = vmatprep.subr.bf16.mxu0 0
    %757 = vmatpush1.bf16.msra.mxu0 %v572
    %758 = vmatprep.subr.bf16.mxu0 0
    %759 = vmatpush1.bf16.msra.mxu0 %v571
    %760 = vmatprep.subr.bf16.mxu0 0
    %761 = vmatpush1.bf16.msra.mxu0 %v570
    %762 = vmatprep.subr.bf16.mxu0 0
    %763 = vmatpush2.bf16.msra.mxu0 %v585
    %764 = vmatprep.subr.bf16.mxu0 0
    %765 = vmatpush2.bf16.msra.mxu0 %v584
    %766 = vmatprep.subr.bf16.mxu0 0
    %767 = vmatpush2.bf16.msra.mxu0 %v583
    %768 = vmatprep.subr.bf16.mxu0 0
    %769 = vmatpush2.bf16.msra.mxu0 %v582
    %770 = vmatprep.subr.bf16.mxu0 0
    %771 = vmatpush2.bf16.msra.mxu0 %v581
    %772 = vmatprep.subr.bf16.mxu0 0
    %773 = vmatpush2.bf16.msra.mxu0 %v580
    %774 = vmatprep.subr.bf16.mxu0 0
    %775 = vmatpush2.bf16.msra.mxu0 %v579
    %776 = vmatprep.subr.bf16.mxu0 0
    %777 = vmatpush2.bf16.msra.mxu0 %v578
    %778 = vmatprep.mubr.bf16.mxu0 %v151
    %779 = vmatmul.mubr.bf16.gmra.mxu0 %v150
    %v780 = vpop.f32.mrf.mxu0
    %v781 = vadd.f32 %v741, %v780
    %v782 = vpop.f32.mrf.mxu0
    %v783 = vpop.f32.mrf.mxu0
    %v784 = vpop.f32.mrf.mxu0
    %785 = vdwg.mxu0
    %786 = vmatprep.subr.bf16.mxu0 0
    %787 = vmatpush1.bf16.msra.mxu0 %v593
    %788 = vmatprep.subr.bf16.mxu0 0
    %789 = vmatpush1.bf16.msra.mxu0 %v592
    %790 = vmatprep.subr.bf16.mxu0 0
    %791 = vmatpush1.bf16.msra.mxu0 %v591
    %792 = vmatprep.subr.bf16.mxu0 0
    %793 = vmatpush1.bf16.msra.mxu0 %v590
    %794 = vmatprep.subr.bf16.mxu0 0
    %795 = vmatpush1.bf16.msra.mxu0 %v589
    %796 = vmatprep.subr.bf16.mxu0 0
    %797 = vmatpush1.bf16.msra.mxu0 %v588
    %798 = vmatprep.subr.bf16.mxu0 0
    %799 = vmatpush1.bf16.msra.mxu0 %v587
    %800 = vmatprep.subr.bf16.mxu0 0
    %801 = vmatpush1.bf16.msra.mxu0 %v586
    %802 = vmatprep.subr.bf16.mxu0 0
    %803 = vmatpush2.bf16.msra.mxu0 %v601
    %804 = vmatprep.subr.bf16.mxu0 0
    %805 = vmatpush2.bf16.msra.mxu0 %v600
    %806 = vmatprep.subr.bf16.mxu0 0
    %807 = vmatpush2.bf16.msra.mxu0 %v599
    %808 = vmatprep.subr.bf16.mxu0 0
    %809 = vmatpush2.bf16.msra.mxu0 %v598
    %810 = vmatprep.subr.bf16.mxu0 0
    %811 = vmatpush2.bf16.msra.mxu0 %v597
    %812 = vmatprep.subr.bf16.mxu0 0
    %813 = vmatpush2.bf16.msra.mxu0 %v596
    %814 = vmatprep.subr.bf16.mxu0 0
    %815 = vmatpush2.bf16.msra.mxu0 %v595
    %816 = vmatprep.subr.bf16.mxu0 0
    %817 = vmatpush2.bf16.msra.mxu0 %v594
    %818 = vmatprep.mubr.bf16.mxu0 %v153
    %819 = vmatmul.mubr.bf16.gmra.mxu0 %v152
    %v820 = vpop.f32.mrf.mxu0
    %v821 = vadd.f32 %v781, %v820
    %v822 = vpop.f32.mrf.mxu0
    %v823 = vpop.f32.mrf.mxu0
    %v824 = vpop.f32.mrf.mxu0
    %825 = vdwg.mxu0
    %v826 = vadd.f32 %v49, %v821
    %827 = vst [vmem:[#allocation2] sm:$0xff] %v826
    // Predicated region
    $region26: #{tpu_custom_call.1} parent=1 // pred_check
      %p828 = pneg %p44
    $region27: #{tpu_custom_call.1} parent=1 // pred_check_branch
      %830 = sbr.rel (%p828) target = $region29
    $region28: #{tpu_custom_call.1} parent=1 // pred_region
      %v831 = vld [vmem:[#allocation2] sm:$0xff]
      %v832 = vld [vmem:[%s2] sm:$0x1]
      %v834 = vlaneseq
      %v835 = vshrl.u32 %v834, 7
      %v836 = vsub.s32 0, %v835
      %v837 = vrot.slane %v832, %v836
      %v839 = vadd.f32 %v831, %v837
      %840 = vst [vmem:[#allocation8] sm:$0xff] %v839
    $region29: #{tpu_custom_call.1} parent=1 // pred_fallthru
      _
    // Predicated region
    $region30: #{tpu_custom_call.1} parent=1 // pred_check
      _
    $region31: #{tpu_custom_call.1} parent=1 // pred_check_branch
      %842 = sbr.rel (0) target = $region33
    $region32: #{tpu_custom_call.1} parent=1 // pred_region
      %s844 = ssub.s32 128, 32
      %845 = vsyncadd [#allocation5], %s844
      %s846 = sshll.u32 [#allocation8], 4
      %s847 = int_to_ptr.vmem [resolvable:$true] %s846
      %852 = dma.vmem_to_hbm [thread:$0]  %s847, 32, %s3, [#allocation5], 32, 32, 2
    $region33: #{tpu_custom_call.1} parent=1 // pred_fallthru
      _
    // Predicated region
    $region34: #{tpu_custom_call.1} parent=1 // pred_check
      _
    $region35: #{tpu_custom_call.1} parent=1 // pred_check_branch
      %854 = sbr.rel (0) target = $region37
    $region36: #{tpu_custom_call.1} parent=1 // pred_region
      %855 = dma.done [#allocation5], 128
    $region37: #{tpu_custom_call.1} parent=1 // pred_fallthru
      _
    %856 = vsyncpa [#allocation4], 1
    %857 = vsyncpa [#allocation7], 1
    %858 = vsyncpa [#allocation5], 1

</llo_original>
